<compile_context>
chip_gen: v7x
topology: tpu7x:2x2x1
jax: 0.10.0
libtpu: 0.0.40
codegen_flags: <defaults>
</compile_context>

<pallas_src>
import functools

import jax
import jax.numpy as jnp
from jax import lax
from jax.experimental import pallas as pl
from jax.experimental.pallas import tpu as pltpu

MARGIN = 1.0
EPS = 1e-7  # matches nn.TripletMarginLoss(margin=1, p=2, eps=1e-07) in __init__

# Above this many rows the one-hot gather's O(B^2) VPU work / (TB, B_pad)
# intermediates stop being worth it; switch to the SMEM-index loop gather.
_ONEHOT_MAX_ROWS = 2048


def _round_up(x, m):
    return (x + m - 1) // m * m


@functools.lru_cache(maxsize=None)
def _vmem_capacity_bytes():
    """Generation-aware VMEM capacity (128 MiB v5e/v6e, 64 MiB/TC v7x)."""
    try:
        return int(pltpu.get_tpu_info().vmem_capacity_bytes)
    except Exception:
        return 64 * 1024 * 1024  # conservative v7x-safe fallback


# ----------------------------- Pallas kernels ------------------------------ #
def _triplet_onehot_kernel(idx_ref, feats_ref, out_ref, *, tb, b_valid):
    """Small-B fast path: fused one-hot MXU gather + triplet hinge for one tile.

    idx_ref  : (TB, 2) int32    [:, 0] = positive row id, [:, 1] = negative row id
    feats_ref: (B_pad, D) f32   full feature matrix, resident in VMEM
                                (constant index_map -> DMA'd from HBM once)
    out_ref  : (1, 8, 128) f32  lane-dense per-tile partial hinge sum
    """
    i = pl.program_id(0)
    b_pad = feats_ref.shape[0]

    feats = feats_ref[...]                                     # (B_pad, D)

    # Anchor rows of this tile: contiguous slice of the resident feats block.
    start = pl.multiple_of(i * tb, 8)
    anchors = feats_ref[pl.ds(start, tb), :]                   # (TB, D)

    # Merged one-hot gather: ONE (2*TB, B_pad) x (B_pad, D) matmul gathers the
    # positives (rows [0, TB)) and negatives (rows [TB, 2*TB)) in a single MXU
    # pass (halves weight-register pushes and result drains vs two matmuls).
    pos_col = idx_ref[:, 0:1]                                  # (TB, 1) int32
    neg_col = idx_ref[:, 1:2]                                  # (TB, 1) int32
    sel = jnp.concatenate([pos_col, neg_col], axis=0)          # (2*TB, 1)
    col = lax.broadcasted_iota(jnp.int32, (2 * tb, b_pad), 1)  # (2*TB, B_pad)
    oh = (col == sel).astype(jnp.float32)                      # no select, just cast
    gathered = jnp.dot(
        oh, feats,
        preferred_element_type=jnp.float32,
        precision=lax.Precision.HIGHEST,                       # exact f32 gather
    )                                                          # (2*TB, D)
    positives = gathered[:tb, :]
    negatives = gathered[tb:, :]

    # torch pairwise_distance(x1, x2, p=2, eps): ||x1 - x2 + eps||_2 over D.
    # (Deliberately not repacked to 128-lane width: this stage is <5% of the
    #  gather cost and a repack would add an XLU relayout copy.)
    d_ap = jnp.sqrt(jnp.sum((anchors - positives + EPS) ** 2, axis=-1, keepdims=True))
    d_an = jnp.sqrt(jnp.sum((anchors - negatives + EPS) ** 2, axis=-1, keepdims=True))
    hinge = jnp.maximum(d_ap - d_an + MARGIN, 0.0)             # (TB, 1)

    # Mask batch-padding rows, then emit this tile's partial sum (lane-dense,
    # unmasked (8,128) store).
    rows = lax.broadcasted_iota(jnp.int32, (tb, 1), 0) + i * tb
    hinge = jnp.where(rows < b_valid, hinge, 0.0)
    out_ref[...] = jnp.full(out_ref.shape, jnp.sum(hinge), jnp.float32)


def _triplet_loopgather_kernel(pos_idx_ref, neg_idx_ref, feats_ref, out_ref,
                               pos_buf, neg_buf, *, tb, b_valid):
    """Large-B path: O(B) SMEM-index row gather + triplet hinge for one tile.

    pos_idx_ref / neg_idx_ref : (B_pad,) int32 in SMEM (scalar prefetch)
    feats_ref                 : (B_pad, D) f32 resident VMEM block
    out_ref                   : (1, 8, 128) f32 per-tile partial hinge sum
    pos_buf / neg_buf         : (TB, D) f32 VMEM scratch for the gathered rows
    """
    i = pl.program_id(0)

    start = pl.multiple_of(i * tb, 8)
    anchors = feats_ref[pl.ds(start, tb), :]                   # (TB, D)

    # Per-row dynamic-sublane copies from the resident feats block into VMEM
    # scratch; indices are cheap scalar reads from SMEM.  No (TB, B_pad)
    # intermediates, so this is the only variant that scales with B.
    def gather_row(r, carry):
        row = i * tb + r
        p = pos_idx_ref[row]
        n = neg_idx_ref[row]
        pos_buf[pl.ds(r, 1), :] = feats_ref[pl.ds(p, 1), :]
        neg_buf[pl.ds(r, 1), :] = feats_ref[pl.ds(n, 1), :]
        return carry

    lax.fori_loop(0, tb, gather_row, 0)

    positives = pos_buf[...]
    negatives = neg_buf[...]

    d_ap = jnp.sqrt(jnp.sum((anchors - positives + EPS) ** 2, axis=-1, keepdims=True))
    d_an = jnp.sqrt(jnp.sum((anchors - negatives + EPS) ** 2, axis=-1, keepdims=True))
    hinge = jnp.maximum(d_ap - d_an + MARGIN, 0.0)             # (TB, 1)

    rows = lax.broadcasted_iota(jnp.int32, (tb, 1), 0) + i * tb
    hinge = jnp.where(rows < b_valid, hinge, 0.0)
    out_ref[...] = jnp.full(out_ref.shape, jnp.sum(hinge), jnp.float32)


def triplet_margin_loss_pallas(feats, pos_idx, neg_idx, *, force_loop_gather=False):
    """Fused gather + TripletMarginLoss(margin=1, p=2, eps=1e-7), mean reduction."""
    b, d = feats.shape

    vmem_cap = _vmem_capacity_bytes()
    small_vmem = vmem_cap <= 64 * 1024 * 1024          # v7x-class per-TC budget
    vmem_limit = (3 * vmem_cap) // 4                   # ~48 MiB v7x, ~96 MiB v5e/v6e

    use_onehot = (not force_loop_gather) and b <= _ONEHOT_MAX_ROWS

    # Tile rows.  v7x-class (2 TCs, 64 MiB VMEM): TB=128 keeps grid >= 2 so the
    # "parallel" axis shards across both TensorCores and the one-hot
    # intermediates (~3*TB*B_pad*4 B) plus the double-buffered lane-padded feats
    # block (2*B_pad*512 B) stay well inside the budget.  v5e/v6e (1 TC, 128 MiB
    # VMEM): larger tiles amortize the ~0.35 us per-grid-step overhead.
    if small_vmem:
        tb = 128 if use_onehot else 256
    else:
        tb = 256 if use_onehot else 512
    tb = min(tb, _round_up(b, 8))

    b_pad = _round_up(b, tb)
    g = b_pad // tb

    feats_f32 = feats.astype(jnp.float32)   # no-op when feats is already f32
    pos_idx = pos_idx.astype(jnp.int32)
    neg_idx = neg_idx.astype(jnp.int32)
    if b_pad != b:
        pad = b_pad - b
        feats_f32 = jnp.pad(feats_f32, ((0, pad), (0, 0)))
        pos_idx = jnp.pad(pos_idx, (0, pad))     # padded rows gather row 0; hinge
        neg_idx = jnp.pad(neg_idx, (0, pad))     # is masked by rows < b below.

    compiler_params = pltpu.CompilerParams(
        dimension_semantics=("parallel",),       # megacore sharding on v7x
        vmem_limit_bytes=int(vmem_limit),
    )
    out_shape = jax.ShapeDtypeStruct((g, 8, 128), jnp.float32)

    if use_onehot:
        idx = jnp.stack([pos_idx, neg_idx], axis=1)            # (B_pad, 2)
        kernel = functools.partial(_triplet_onehot_kernel, tb=tb, b_valid=b)
        partials = pl.pallas_call(
            kernel,
            out_shape=out_shape,
            grid=(g,),
            in_specs=[
                pl.BlockSpec((tb, 2), lambda i: (i, 0)),       # per-tile indices
                # feats: constant index_map -> one HBM read, resident in VMEM.
                # TODO(synk): pipeline_mode=pl.Buffered(1) would halve this
                # block's VMEM footprint; the TB/vmem budget above conservatively
                # accounts for the default double buffer instead.
                pl.BlockSpec((b_pad, d), lambda i: (0, 0)),
            ],
            out_specs=pl.BlockSpec((1, 8, 128), lambda i: (i, 0, 0)),
            compiler_params=compiler_params,
        )(idx, feats_f32)
    else:
        kernel = functools.partial(_triplet_loopgather_kernel, tb=tb, b_valid=b)
        grid_spec = pltpu.PrefetchScalarGridSpec(
            num_scalar_prefetch=2,                              # pos_idx, neg_idx -> SMEM
            grid=(g,),
            in_specs=[pl.BlockSpec((b_pad, d), lambda i, p, n: (0, 0))],
            out_specs=pl.BlockSpec((1, 8, 128), lambda i, p, n: (i, 0, 0)),
            scratch_shapes=[
                pltpu.VMEM((tb, d), jnp.float32),               # gathered positives
                pltpu.VMEM((tb, d), jnp.float32),               # gathered negatives
            ],
        )
        partials = pl.pallas_call(
            kernel,
            out_shape=out_shape,
            grid_spec=grid_spec,
            compiler_params=compiler_params,
        )(pos_idx, neg_idx, feats_f32)

    # Finish the mean in JAX from the lane-dense per-tile partial sums.
    return jnp.sum(partials[:, 0, 0]) / jnp.float32(b)


# ------------------------------ JAX glue ---------------------------------- #
def _random_choice_from_mask(mask, u, fallback_idx):
    """Uniformly pick one True column per row of `mask`; fallback when row empty."""
    counts = jnp.sum(mask, axis=1)                             # (B,)
    k = jnp.floor(u * counts).astype(jnp.int32)
    k = jnp.clip(k, 0, jnp.maximum(counts - 1, 0))
    cum = jnp.cumsum(mask.astype(jnp.int32), axis=1)           # (B, B)
    sel = (cum == (k[:, None] + 1)) & mask
    idx = jnp.argmax(sel, axis=1)
    return jnp.where(counts > 0, idx, fallback_idx)


def _sample_pos_neg_indices(labels, key):
    b = labels.shape[0]
    labels = labels.astype(jnp.int32)
    row_ids = jnp.arange(b, dtype=jnp.int32)

    # TODO(synk): O(B^2) mask/cumsum sampling dominates at very large B; a
    # sort/bucket-by-label sampler would replace it.  Kept as-is because it
    # reproduces the reference module's per-row uniform choice exactly.
    pos_mask = labels[None, :] == labels[:, None]              # same label
    neg_mask = labels[None, :] == (1 - labels)[:, None]        # opposite label

    kp, kn = jax.random.split(key)
    u_pos = jax.random.uniform(kp, (b,))
    u_neg = jax.random.uniform(kn, (b,))

    # TODO(synk): the torch code leaves positive_feat / negtive_feat undefined
    # when exactly one candidate exists; here that lone candidate is used.
    pos_idx = _random_choice_from_mask(pos_mask, u_pos, row_ids)
    neg_idx = _random_choice_from_mask(neg_mask, u_neg, row_ids)
    return pos_idx, neg_idx


@functools.partial(jax.jit, static_argnames=("force_loop_gather",))
def patient_triplet_loss(feats, labels, key, force_loop_gather=False):
    """JAX/Pallas equivalent of patientTripletLoss.forward(feats, labels)."""
    pos_idx, neg_idx = _sample_pos_neg_indices(labels, key)
    return triplet_margin_loss_pallas(feats, pos_idx, neg_idx,
                                      force_loop_gather=force_loop_gather)


def _patient_triplet_loss_ref(feats, labels, key):
    """Pure-JAX reference (same sampling) for a correctness sanity check."""
    pos_idx, neg_idx = _sample_pos_neg_indices(labels, key)
    a = feats.astype(jnp.float32)
    p = jnp.take(a, pos_idx, axis=0)
    n = jnp.take(a, neg_idx, axis=0)
    d_ap = jnp.sqrt(jnp.sum((a - p + EPS) ** 2, axis=-1))
    d_an = jnp.sqrt(jnp.sum((a - n + EPS) ** 2, axis=-1))
    return jnp.mean(jnp.maximum(d_ap - d_an + MARGIN, 0.0))


# ------------------------------ main -------------------------------------- #
if __name__ == "__main__":
    B, D = 8, 32  # D=32 consistent with the (unused) nn.BatchNorm1d(32)

    key = jax.random.PRNGKey(0)
    k_feats, k_labels, k_sample, k2f, k2l, k2s = jax.random.split(key, 6)

    feats = jax.random.normal(k_feats, (B, D), dtype=jnp.float32)
    labels = jax.random.bernoulli(k_labels, 0.5, (B,)).astype(jnp.int32)

    # Small-B fast path (merged one-hot MXU gather).
    loss = jax.block_until_ready(patient_triplet_loss(feats, labels, k_sample))
    ref = jax.block_until_ready(_patient_triplet_loss_ref(feats, labels, k_sample))
    assert loss.shape == () and jnp.isfinite(loss)
    assert jnp.allclose(loss, ref, rtol=1e-5, atol=1e-5), (loss, ref)

    # Large-B SMEM-index loop-gather path, forced at a small shape so both code
    # paths are compile- and correctness-checked.
    B2 = 24
    feats2 = jax.random.normal(k2f, (B2, D), dtype=jnp.float32)
    labels2 = jax.random.bernoulli(k2l, 0.5, (B2,)).astype(jnp.int32)
    loss2 = jax.block_until_ready(
        patient_triplet_loss(feats2, labels2, k2s, force_loop_gather=True))
    ref2 = jax.block_until_ready(_patient_triplet_loss_ref(feats2, labels2, k2s))
    assert loss2.shape == () and jnp.isfinite(loss2)
    assert jnp.allclose(loss2, ref2, rtol=1e-5, atol=1e-5), (loss2, ref2)

    print("KERNEL_OK")
</pallas_src>

<mosaic_0001>
module attributes {stable_mosaic.version = 11 : i64} {
  func.func @_triplet_onehot_kernel(%arg0: i32, %arg1: memref<8x2xi32, #tpu.memory_space<vmem>>, %arg2: memref<8x32xf32, #tpu.memory_space<vmem>>, %arg3: memref<1x8x128xf32, #tpu.memory_space<vmem>>) attributes {dimension_semantics = [#tpu.dimension_semantics<parallel>], iteration_bounds = array<i64: 1>, scalar_prefetch = 0 : i64, scratch_operands = 0 : i64, tpu.core_type = #tpu.core_type<tc>, window_params = [{transform_indices = @transform_0, window_bounds = array<i64: 8, 2>}, {pipeline_mode = #tpu.pipeline_mode<synchronous>, transform_indices = @transform_1, window_bounds = array<i64: 8, 32>}, {transform_indices = @transform_2, window_bounds = array<i64: 1, 8, 128>}]} {
    %c0 = arith.constant 0 : index
    %c0_0 = arith.constant 0 : index
    %0 = vector.load %arg2[%c0, %c0_0] : memref<8x32xf32, #tpu.memory_space<vmem>>, vector<8x32xf32>
    %c8_i32 = arith.constant 8 : i32
    %1 = arith.muli %arg0, %c8_i32 : i32
    %2 = tpu.assume_multiple %1, 8 : i32
    %3 = arith.index_cast %2 : i32 to index
    %c0_1 = arith.constant 0 : index
    %4 = vector.load %arg2[%3, %c0_1] : memref<8x32xf32, #tpu.memory_space<vmem>>, vector<8x32xf32>
    %c0_2 = arith.constant 0 : index
    %c0_3 = arith.constant 0 : index
    %5 = vector.load %arg1[%c0_2, %c0_3] : memref<8x2xi32, #tpu.memory_space<vmem>>, vector<8x1xi32>
    %c0_4 = arith.constant 0 : index
    %c1 = arith.constant 1 : index
    %6 = vector.load %arg1[%c0_4, %c1] : memref<8x2xi32, #tpu.memory_space<vmem>>, vector<8x1xi32>
    %7 = tpu.concatenate %5, %6 in 0 : vector<8x1xi32>, vector<8x1xi32> -> vector<16x1xi32>
    %8 = tpu.iota {dimensions = array<i32: 1>} : vector<16x8xi32>
    %9 = vector.broadcast %7 : vector<16x1xi32> to vector<16x8xi32>
    %10 = arith.cmpi eq, %8, %9 : vector<16x8xi32>
    %11 = arith.extui %10 : vector<16x8xi1> to vector<16x8xi32>
    %12 = arith.sitofp %11 : vector<16x8xi32> to vector<16x8xf32>
    %cst = arith.constant dense<0.000000e+00> : vector<16x32xf32>
    %13 = tpu.matmul %12, %0, %cst {dimension_numbers = #tpu.dot_dimension_numbers<[1], [0], [0], [1], [0, 0, 1, 1], [], []>, precision = #tpu.contract_precision<fp32>} : vector<16x8xf32>, vector<8x32xf32>, vector<16x32xf32> -> vector<16x32xf32>
    %14 = vector.extract_strided_slice %13 {offsets = [0, 0], sizes = [8, 32], strides = [1, 1]} : vector<16x32xf32> to vector<8x32xf32>
    %15 = vector.extract_strided_slice %13 {offsets = [8, 0], sizes = [8, 32], strides = [1, 1]} : vector<16x32xf32> to vector<8x32xf32>
    %16 = arith.subf %4, %14 : vector<8x32xf32>
    %cst_5 = arith.constant 1.000000e-07 : f32
    %17 = vector.broadcast %cst_5 : f32 to vector<8x32xf32>
    %18 = arith.addf %16, %17 : vector<8x32xf32>
    %19 = arith.mulf %18, %18 : vector<8x32xf32>
    %cst_6 = arith.constant dense<0.000000e+00> : vector<8xf32>
    %20 = vector.multi_reduction <add>, %19, %cst_6 [1] : vector<8x32xf32> to vector<8xf32>
    %21 = vector.shape_cast %20 : vector<8xf32> to vector<8x1xf32>
    %22 = math.sqrt %21 : vector<8x1xf32>
    %23 = arith.subf %4, %15 : vector<8x32xf32>
    %cst_7 = arith.constant 1.000000e-07 : f32
    %24 = vector.broadcast %cst_7 : f32 to vector<8x32xf32>
    %25 = arith.addf %23, %24 : vector<8x32xf32>
    %26 = arith.mulf %25, %25 : vector<8x32xf32>
    %cst_8 = arith.constant dense<0.000000e+00> : vector<8xf32>
    %27 = vector.multi_reduction <add>, %26, %cst_8 [1] : vector<8x32xf32> to vector<8xf32>
    %28 = vector.shape_cast %27 : vector<8xf32> to vector<8x1xf32>
    %29 = math.sqrt %28 : vector<8x1xf32>
    %30 = arith.subf %22, %29 : vector<8x1xf32>
    %cst_9 = arith.constant 1.000000e+00 : f32
    %31 = vector.broadcast %cst_9 : f32 to vector<8x1xf32>
    %32 = arith.addf %30, %31 : vector<8x1xf32>
    %cst_10 = arith.constant 0.000000e+00 : f32
    %33 = vector.broadcast %cst_10 : f32 to vector<8x1xf32>
    %34 = arith.maximumf %32, %33 : vector<8x1xf32>
    %35 = tpu.iota {dimensions = array<i32: 0>} : vector<8x1xi32>
    %c8_i32_11 = arith.constant 8 : i32
    %36 = arith.muli %arg0, %c8_i32_11 : i32
    %37 = vector.broadcast %36 : i32 to vector<8x1xi32>
    %38 = arith.addi %35, %37 : vector<8x1xi32>
    %c8_i32_12 = arith.constant 8 : i32
    %39 = vector.broadcast %c8_i32_12 : i32 to vector<8x1xi32>
    %40 = arith.cmpi slt, %38, %39 : vector<8x1xi32>
    %cst_13 = arith.constant 0.000000e+00 : f32
    %41 = vector.broadcast %cst_13 : f32 to vector<8x1xf32>
    %42 = arith.select %40, %34, %41 : vector<8x1xi1>, vector<8x1xf32>
    %43 = vector.shape_cast %42 : vector<8x1xf32> to vector<1x8x1xf32>
    %cst_14 = arith.constant dense<0.000000e+00> : vector<1xf32>
    %44 = vector.multi_reduction <add>, %43, %cst_14 [1, 2] : vector<1x8x1xf32> to vector<1xf32>
    %45 = vector.shape_cast %44 : vector<1xf32> to vector<1x1x1xf32>
    %46 = vector.extract %45[0, 0, 0] : f32 from vector<1x1x1xf32>
    %47 = vector.broadcast %46 : f32 to vector<1x8x128xf32>
    %c0_15 = arith.constant 0 : index
    %c0_16 = arith.constant 0 : index
    %c0_17 = arith.constant 0 : index
    %48 = vector.load %arg3[%c0_15, %c0_16, %c0_17] : memref<1x8x128xf32, #tpu.memory_space<vmem>>, vector<1x8x128xf32>
    tpu.vector_store %arg3[%c0_15, %c0_16, %c0_17], %47 {strides = array<i32>} : memref<1x8x128xf32, #tpu.memory_space<vmem>>, vector<1x8x128xf32>,
    return
  }
  func.func @transform_0(%arg0: i32) -> (i32, i32) {
    %c0_i32 = arith.constant 0 : i32
    %c0_i32_0 = arith.constant 0 : i32
    return %arg0, %c0_i32 : i32, i32
  }
  func.func @transform_1(%arg0: i32) -> (i32, i32) {
    %c0_i32 = arith.constant 0 : i32
    %c0_i32_0 = arith.constant 0 : i32
    %c0_i32_1 = arith.constant 0 : i32
    return %c0_i32, %c0_i32_0 : i32, i32
  }
  func.func @transform_2(%arg0: i32) -> (i32, i32, i32) {
    %c0_i32 = arith.constant 0 : i32
    %c0_i32_0 = arith.constant 0 : i32
    %c0_i32_1 = arith.constant 0 : i32
    return %arg0, %c0_i32, %c0_i32_0 : i32, i32, i32
  }
}

</mosaic_0001>

<llo_original>
// kernel: patient_triplet_loss.1
$region0: #{patient_triplet_loss.1}
  #allocation0 [shape = 'u32[]', space=smem, size = 0x4, offset = 0x4, fixed_abs, tag = 'smem constant byte address 0x4 - core index']
  #allocation1 [shape = 'u32[144,128]{1,0:T(1,128)}', space=vmem, size = 0x12000, scoped, tag = 'internal scratch']
  %s0 = inlined_call_operand.vmem [shape: s32[8,2], index: 0, kind: input, shape index: {}]
  %s1 = inlined_call_operand.vmem [shape: f32[8,32], index: 1, kind: input, shape index: {}]
  %s2 = inlined_call_operand.vmem [shape: f32[1,8,128], index: 2, kind: output, shape index: {}]
  %s3 = sld [smem:[#allocation0]]
  $region18: #{patient_triplet_loss.1} parent=0
    _
  %s5 = ssub.s32 1, %s3
  %s6 = scalar_select 0, %s5, %s3
  // Predicated region
  $region2: #{patient_triplet_loss.1} parent=0 // pred_check
    _
  $region3: #{patient_triplet_loss.1} parent=0 // pred_check_branch
    %8 = sbr.rel (0) target = $region5
  $region4: #{patient_triplet_loss.1} parent=0 // pred_region
    _
  $region5: #{patient_triplet_loss.1} parent=0 // pred_fallthru
    _
  // Predicated region
  $region6: #{patient_triplet_loss.1} parent=0 // pred_check
    _
  $region7: #{patient_triplet_loss.1} parent=0 // pred_check_branch
    %10 = sbr.rel (0) target = $region9
  $region8: #{patient_triplet_loss.1} parent=0 // pred_region
    _
  $region9: #{patient_triplet_loss.1} parent=0 // pred_fallthru
    _
  %v11 = vld [vmem:[%s1] sm:$0xff]
  %s12 = smul.u32 0, 8
  %s13 = scalar_lea.vmem %s1, %s12
  %v14 = vld [vmem:[%s13] sm:$0xff]
  %v15 = vld [vmem:[%s0] sm:$0xff]
  %16 = vrot.lane.b32.xlu0 %v15, 127
  %v17 = vpop.permute.xlu0 %16
  %v18 = vlaneseq
  %v19 = vand.u32 %v18, 127
  %20 = vset.pattern.permute.xlu0 0
  %21 = vperm.xlu0 %20, %v15
  %v22 = vpop.permute.xlu0 %21
  %23 = vset.pattern.permute.xlu0 0
  %24 = vperm.xlu0 %23, %v17
  %v25 = vpop.permute.xlu0 %24
  %vm26 = vcmp.eq.s32.totalorder %v19, %v22
  %vm27 = vcmp.eq.s32.totalorder %v19, %v25
  %v28 = vsel %vm26, 1, 0
  %v29 = vsel %vm27, 1, 0
  %v30 = vcvt.s32.f32 %v28
  %v31 = vcvt.s32.f32 %v29
  %vm32 = vcmask 64512
  %v34 = vsel %vm32, %v30, 0
  %v37 = vsel %vm32, %v31, 0
  %39 = vmatprep.subr.mxu0 0.0
  %v40 = vand.u32 %v11, 4294901760
  %41 = vmatpush1.msra.mxu0 %v40
  %42 = vmatprep.subr.mxu0 0.0
  %43 = vmatpush1.msra.mxu0 0.0
  %44 = vmatprep.subr.mxu0 0.0
  %45 = vmatpush1.msra.mxu0 0.0
  %46 = vmatprep.subr.mxu0 0.0
  %47 = vmatpush1.msra.mxu0 0.0
  %48 = vmatprep.subr.mxu0 0.0
  %49 = vmatpush1.msra.mxu0 0.0
  %50 = vmatprep.subr.mxu0 0.0
  %51 = vmatpush1.msra.mxu0 0.0
  %52 = vmatprep.subr.mxu0 0.0
  %53 = vmatpush1.msra.mxu0 0.0
  %54 = vmatprep.subr.mxu0 0.0
  %55 = vmatpush1.msra.mxu0 0.0
  %56 = vmatprep.subr.mxu0 0.0
  %57 = vmatpush1.msra.mxu0 0.0
  %58 = vmatprep.subr.mxu0 0.0
  %59 = vmatpush1.msra.mxu0 0.0
  %60 = vmatprep.subr.mxu0 0.0
  %61 = vmatpush1.msra.mxu0 0.0
  %62 = vmatprep.subr.mxu0 0.0
  %63 = vmatpush1.msra.mxu0 0.0
  %64 = vmatprep.subr.mxu0 0.0
  %65 = vmatpush1.msra.mxu0 0.0
  %66 = vmatprep.subr.mxu0 0.0
  %67 = vmatpush1.msra.mxu0 0.0
  %68 = vmatprep.subr.mxu0 0.0
  %69 = vmatpush1.msra.mxu0 0.0
  %70 = vmatprep.subr.mxu0 0.0
  %71 = vmatpush1.msra.mxu0 0.0
  %72 = vmatprep.subr.mxu0 0.0
  %73 = vmatpush1.msra.mxu0 0.0
  %74 = vmatprep.subr.mxu0 0.0
  %75 = vmatpush1.msra.mxu0 0.0
  %76 = vmatprep.subr.mxu0 0.0
  %77 = vmatpush1.msra.mxu0 0.0
  %78 = vmatprep.subr.mxu0 0.0
  %79 = vmatpush1.msra.mxu0 0.0
  %80 = vmatprep.subr.mxu0 0.0
  %81 = vmatpush1.msra.mxu0 0.0
  %82 = vmatprep.subr.mxu0 0.0
  %83 = vmatpush1.msra.mxu0 0.0
  %84 = vmatprep.subr.mxu0 0.0
  %85 = vmatpush1.msra.mxu0 0.0
  %86 = vmatprep.subr.mxu0 0.0
  %87 = vmatpush1.msra.mxu0 0.0
  %88 = vmatprep.subr.mxu0 0.0
  %89 = vmatpush1.msra.mxu0 0.0
  %90 = vmatprep.subr.mxu0 0.0
  %91 = vmatpush1.msra.mxu0 0.0
  %92 = vmatprep.subr.mxu0 0.0
  %93 = vmatpush1.msra.mxu0 0.0
  %94 = vmatprep.subr.mxu0 0.0
  %95 = vmatpush1.msra.mxu0 0.0
  %96 = vmatprep.subr.mxu0 0.0
  %97 = vmatpush1.msra.mxu0 0.0
  %98 = vmatprep.subr.mxu0 0.0
  %99 = vmatpush1.msra.mxu0 0.0
  %100 = vmatprep.subr.mxu0 0.0
  %101 = vmatpush1.msra.mxu0 0.0
  %102 = vmatprep.subr.mxu0 0.0
  %103 = vmatpush1.msra.mxu0 0.0
  %104 = vmatprep.mubr.f32.mxu0 0.0
  %v105 = vand.u32 %v34, 4294901760
  %v106 = vsub.f32 %v34, %v105
  %v107 = vand.u32 %v106, 4294901760
  %v108 = vsub.f32 %v106, %v107
  %v109 = vand.u32 %v108, 4294901760
  %110 = vmatmul.mubr.f32.gmra.mrb[0].mxu0 %v109
  %v111 = vpop.f32.mrb[0].mxu0
  %v112 = vadd.f32 0.0, %v111
  %v113 = vpop.f32.mrb[0].mxu0
  %114 = vmatprep.mubr.f32.mxu0 0.0
  %v115 = vand.u32 %v37, 4294901760
  %v116 = vsub.f32 %v37, %v115
  %v117 = vand.u32 %v116, 4294901760
  %v118 = vsub.f32 %v116, %v117
  %v119 = vand.u32 %v118, 4294901760
  %120 = vmatmul.mubr.f32.gmra.mrb[0].mxu0 %v119
  %v121 = vpop.f32.mrb[0].mxu0
  %v122 = vadd.f32 0.0, %v121
  %v123 = vpop.f32.mrb[0].mxu0
  %124 = vdwg.mxu0
  %125 = vmatprep.subr.mxu0 0.0
  %v126 = vand.u32 %v11, 4294901760
  %v127 = vsub.f32 %v11, %v126
  %v128 = vand.u32 %v127, 4294901760
  %v129 = vsub.f32 %v127, %v128
  %v130 = vand.u32 %v129, 4294901760
  %131 = vmatpush1.msra.mxu0 %v130
  %132 = vmatprep.subr.mxu0 0.0
  %133 = vmatpush1.msra.mxu0 0.0
  %134 = vmatprep.subr.mxu0 0.0
  %135 = vmatpush1.msra.mxu0 0.0
  %136 = vmatprep.subr.mxu0 0.0
  %137 = vmatpush1.msra.mxu0 0.0
  %138 = vmatprep.subr.mxu0 0.0
  %139 = vmatpush1.msra.mxu0 0.0
  %140 = vmatprep.subr.mxu0 0.0
  %141 = vmatpush1.msra.mxu0 0.0
  %142 = vmatprep.subr.mxu0 0.0
  %143 = vmatpush1.msra.mxu0 0.0
  %144 = vmatprep.subr.mxu0 0.0
  %145 = vmatpush1.msra.mxu0 0.0
  %146 = vmatprep.subr.mxu0 0.0
  %147 = vmatpush1.msra.mxu0 0.0
  %148 = vmatprep.subr.mxu0 0.0
  %149 = vmatpush1.msra.mxu0 0.0
  %150 = vmatprep.subr.mxu0 0.0
  %151 = vmatpush1.msra.mxu0 0.0
  %152 = vmatprep.subr.mxu0 0.0
  %153 = vmatpush1.msra.mxu0 0.0
  %154 = vmatprep.subr.mxu0 0.0
  %155 = vmatpush1.msra.mxu0 0.0
  %156 = vmatprep.subr.mxu0 0.0
  %157 = vmatpush1.msra.mxu0 0.0
  %158 = vmatprep.subr.mxu0 0.0
  %159 = vmatpush1.msra.mxu0 0.0
  %160 = vmatprep.subr.mxu0 0.0
  %161 = vmatpush1.msra.mxu0 0.0
  %162 = vmatprep.subr.mxu0 0.0
  %163 = vmatpush1.msra.mxu0 0.0
  %164 = vmatprep.subr.mxu0 0.0
  %165 = vmatpush1.msra.mxu0 0.0
  %166 = vmatprep.subr.mxu0 0.0
  %167 = vmatpush1.msra.mxu0 0.0
  %168 = vmatprep.subr.mxu0 0.0
  %169 = vmatpush1.msra.mxu0 0.0
  %170 = vmatprep.subr.mxu0 0.0
  %171 = vmatpush1.msra.mxu0 0.0
  %172 = vmatprep.subr.mxu0 0.0
  %173 = vmatpush1.msra.mxu0 0.0
  %174 = vmatprep.subr.mxu0 0.0
  %175 = vmatpush1.msra.mxu0 0.0
  %176 = vmatprep.subr.mxu0 0.0
  %177 = vmatpush1.msra.mxu0 0.0
  %178 = vmatprep.subr.mxu0 0.0
  %179 = vmatpush1.msra.mxu0 0.0
  %180 = vmatprep.subr.mxu0 0.0
  %181 = vmatpush1.msra.mxu0 0.0
  %182 = vmatprep.subr.mxu0 0.0
  %183 = vmatpush1.msra.mxu0 0.0
  %184 = vmatprep.subr.mxu0 0.0
  %185 = vmatpush1.msra.mxu0 0.0
  %186 = vmatprep.subr.mxu0 0.0
  %187 = vmatpush1.msra.mxu0 0.0
  %188 = vmatprep.subr.mxu0 0.0
  %189 = vmatpush1.msra.mxu0 0.0
  %190 = vmatprep.subr.mxu0 0.0
  %191 = vmatpush1.msra.mxu0 0.0
  %192 = vmatprep.subr.mxu0 0.0
  %193 = vmatpush1.msra.mxu0 0.0
  %194 = vmatprep.mubr.f32.mxu0 0.0
  %v195 = vand.u32 %v34, 4294901760
  %196 = vmatmul.mubr.f32.gmra.mrb[0].mxu0 %v195
  %v197 = vpop.f32.mrb[0].mxu0
  %v198 = vadd.f32 %v112, %v197
  %v199 = vpop.f32.mrb[0].mxu0
  %200 = vmatprep.mubr.f32.mxu0 0.0
  %v201 = vand.u32 %v37, 4294901760
  %202 = vmatmul.mubr.f32.gmra.mrb[0].mxu0 %v201
  %v203 = vpop.f32.mrb[0].mxu0
  %v204 = vadd.f32 %v122, %v203
  %v205 = vpop.f32.mrb[0].mxu0
  %206 = vdwg.mxu0
  %207 = vmatprep.subr.mxu0 0.0
  %v208 = vand.u32 %v11, 4294901760
  %v209 = vsub.f32 %v11, %v208
  %210 = vmatpush1.msra.mxu0 %v209
  %211 = vmatprep.subr.mxu0 0.0
  %212 = vmatpush1.msra.mxu0 0.0
  %213 = vmatprep.subr.mxu0 0.0
  %214 = vmatpush1.msra.mxu0 0.0
  %215 = vmatprep.subr.mxu0 0.0
  %216 = vmatpush1.msra.mxu0 0.0
  %217 = vmatprep.subr.mxu0 0.0
  %218 = vmatpush1.msra.mxu0 0.0
  %219 = vmatprep.subr.mxu0 0.0
  %220 = vmatpush1.msra.mxu0 0.0
  %221 = vmatprep.subr.mxu0 0.0
  %222 = vmatpush1.msra.mxu0 0.0
  %223 = vmatprep.subr.mxu0 0.0
  %224 = vmatpush1.msra.mxu0 0.0
  %225 = vmatprep.subr.mxu0 0.0
  %226 = vmatpush1.msra.mxu0 0.0
  %227 = vmatprep.subr.mxu0 0.0
  %228 = vmatpush1.msra.mxu0 0.0
  %229 = vmatprep.subr.mxu0 0.0
  %230 = vmatpush1.msra.mxu0 0.0
  %231 = vmatprep.subr.mxu0 0.0
  %232 = vmatpush1.msra.mxu0 0.0
  %233 = vmatprep.subr.mxu0 0.0
  %234 = vmatpush1.msra.mxu0 0.0
  %235 = vmatprep.subr.mxu0 0.0
  %236 = vmatpush1.msra.mxu0 0.0
  %237 = vmatprep.subr.mxu0 0.0
  %238 = vmatpush1.msra.mxu0 0.0
  %239 = vmatprep.subr.mxu0 0.0
  %240 = vmatpush1.msra.mxu0 0.0
  %241 = vmatprep.subr.mxu0 0.0
  %242 = vmatpush1.msra.mxu0 0.0
  %243 = vmatprep.subr.mxu0 0.0
  %244 = vmatpush1.msra.mxu0 0.0
  %245 = vmatprep.subr.mxu0 0.0
  %246 = vmatpush1.msra.mxu0 0.0
  %247 = vmatprep.subr.mxu0 0.0
  %248 = vmatpush1.msra.mxu0 0.0
  %249 = vmatprep.subr.mxu0 0.0
  %250 = vmatpush1.msra.mxu0 0.0
  %251 = vmatprep.subr.mxu0 0.0
  %252 = vmatpush1.msra.mxu0 0.0
  %253 = vmatprep.subr.mxu0 0.0
  %254 = vmatpush1.msra.mxu0 0.0
  %255 = vmatprep.subr.mxu0 0.0
  %256 = vmatpush1.msra.mxu0 0.0
  %257 = vmatprep.subr.mxu0 0.0
  %258 = vmatpush1.msra.mxu0 0.0
  %259 = vmatprep.subr.mxu0 0.0
  %260 = vmatpush1.msra.mxu0 0.0
  %261 = vmatprep.subr.mxu0 0.0
  %262 = vmatpush1.msra.mxu0 0.0
  %263 = vmatprep.subr.mxu0 0.0
  %264 = vmatpush1.msra.mxu0 0.0
  %265 = vmatprep.subr.mxu0 0.0
  %266 = vmatpush1.msra.mxu0 0.0
  %267 = vmatprep.subr.mxu0 0.0
  %268 = vmatpush1.msra.mxu0 0.0
  %269 = vmatprep.subr.mxu0 0.0
  %270 = vmatpush1.msra.mxu0 0.0
  %271 = vmatprep.subr.mxu0 0.0
  %272 = vmatpush1.msra.mxu0 0.0
  %273 = vmatprep.mubr.f32.mxu0 0.0
  %v274 = vand.u32 %v34, 4294901760
  %v275 = vsub.f32 %v34, %v274
  %276 = vmatmul.mubr.f32.gmra.mrb[0].mxu0 %v275
  %v277 = vpop.f32.mrb[0].mxu0
  %v278 = vadd.f32 %v198, %v277
  %v279 = vpop.f32.mrb[0].mxu0
  %280 = vmatprep.mubr.f32.mxu0 0.0
  %v281 = vand.u32 %v37, 4294901760
  %v282 = vsub.f32 %v37, %v281
  %283 = vmatmul.mubr.f32.gmra.mrb[0].mxu0 %v282
  %v284 = vpop.f32.mrb[0].mxu0
  %v285 = vadd.f32 %v204, %v284
  %v286 = vpop.f32.mrb[0].mxu0
  %287 = vdwg.mxu0
  %288 = vmatprep.subr.mxu0 0.0
  %v289 = vand.u32 %v11, 4294901760
  %290 = vmatpush1.msra.mxu0 %v289
  %291 = vmatprep.subr.mxu0 0.0
  %292 = vmatpush1.msra.mxu0 0.0
  %293 = vmatprep.subr.mxu0 0.0
  %294 = vmatpush1.msra.mxu0 0.0
  %295 = vmatprep.subr.mxu0 0.0
  %296 = vmatpush1.msra.mxu0 0.0
  %297 = vmatprep.subr.mxu0 0.0
  %298 = vmatpush1.msra.mxu0 0.0
  %299 = vmatprep.subr.mxu0 0.0
  %300 = vmatpush1.msra.mxu0 0.0
  %301 = vmatprep.subr.mxu0 0.0
  %302 = vmatpush1.msra.mxu0 0.0
  %303 = vmatprep.subr.mxu0 0.0
  %304 = vmatpush1.msra.mxu0 0.0
  %305 = vmatprep.subr.mxu0 0.0
  %306 = vmatpush1.msra.mxu0 0.0
  %307 = vmatprep.subr.mxu0 0.0
  %308 = vmatpush1.msra.mxu0 0.0
  %309 = vmatprep.subr.mxu0 0.0
  %310 = vmatpush1.msra.mxu0 0.0
  %311 = vmatprep.subr.mxu0 0.0
  %312 = vmatpush1.msra.mxu0 0.0
  %313 = vmatprep.subr.mxu0 0.0
  %314 = vmatpush1.msra.mxu0 0.0
  %315 = vmatprep.subr.mxu0 0.0
  %316 = vmatpush1.msra.mxu0 0.0
  %317 = vmatprep.subr.mxu0 0.0
  %318 = vmatpush1.msra.mxu0 0.0
  %319 = vmatprep.subr.mxu0 0.0
  %320 = vmatpush1.msra.mxu0 0.0
  %321 = vmatprep.subr.mxu0 0.0
  %322 = vmatpush1.msra.mxu0 0.0
  %323 = vmatprep.subr.mxu0 0.0
  %324 = vmatpush1.msra.mxu0 0.0
  %325 = vmatprep.subr.mxu0 0.0
  %326 = vmatpush1.msra.mxu0 0.0
  %327 = vmatprep.subr.mxu0 0.0
  %328 = vmatpush1.msra.mxu0 0.0
  %329 = vmatprep.subr.mxu0 0.0
  %330 = vmatpush1.msra.mxu0 0.0
  %331 = vmatprep.subr.mxu0 0.0
  %332 = vmatpush1.msra.mxu0 0.0
  %333 = vmatprep.subr.mxu0 0.0
  %334 = vmatpush1.msra.mxu0 0.0
  %335 = vmatprep.subr.mxu0 0.0
  %336 = vmatpush1.msra.mxu0 0.0
  %337 = vmatprep.subr.mxu0 0.0
  %338 = vmatpush1.msra.mxu0 0.0
  %339 = vmatprep.subr.mxu0 0.0
  %340 = vmatpush1.msra.mxu0 0.0
  %341 = vmatprep.subr.mxu0 0.0
  %342 = vmatpush1.msra.mxu0 0.0
  %343 = vmatprep.subr.mxu0 0.0
  %344 = vmatpush1.msra.mxu0 0.0
  %345 = vmatprep.subr.mxu0 0.0
  %346 = vmatpush1.msra.mxu0 0.0
  %347 = vmatprep.subr.mxu0 0.0
  %348 = vmatpush1.msra.mxu0 0.0
  %349 = vmatprep.subr.mxu0 0.0
  %350 = vmatpush1.msra.mxu0 0.0
  %351 = vmatprep.subr.mxu0 0.0
  %352 = vmatpush1.msra.mxu0 0.0
  %353 = vmatprep.mubr.f32.mxu0 0.0
  %v354 = vand.u32 %v34, 4294901760
  %v355 = vsub.f32 %v34, %v354
  %v356 = vand.u32 %v355, 4294901760
  %357 = vmatmul.mubr.f32.gmra.mrb[0].mxu0 %v356
  %v358 = vpop.f32.mrb[0].mxu0
  %v359 = vadd.f32 %v278, %v358
  %v360 = vpop.f32.mrb[0].mxu0
  %361 = vmatprep.mubr.f32.mxu0 0.0
  %v362 = vand.u32 %v37, 4294901760
  %v363 = vsub.f32 %v37, %v362
  %v364 = vand.u32 %v363, 4294901760
  %365 = vmatmul.mubr.f32.gmra.mrb[0].mxu0 %v364
  %v366 = vpop.f32.mrb[0].mxu0
  %v367 = vadd.f32 %v285, %v366
  %v368 = vpop.f32.mrb[0].mxu0
  %369 = vdwg.mxu0
  %370 = vmatprep.subr.mxu0 0.0
  %v371 = vand.u32 %v11, 4294901760
  %v372 = vsub.f32 %v11, %v371
  %v373 = vand.u32 %v372, 4294901760
  %374 = vmatpush1.msra.mxu0 %v373
  %375 = vmatprep.subr.mxu0 0.0
  %376 = vmatpush1.msra.mxu0 0.0
  %377 = vmatprep.subr.mxu0 0.0
  %378 = vmatpush1.msra.mxu0 0.0
  %379 = vmatprep.subr.mxu0 0.0
  %380 = vmatpush1.msra.mxu0 0.0
  %381 = vmatprep.subr.mxu0 0.0
  %382 = vmatpush1.msra.mxu0 0.0
  %383 = vmatprep.subr.mxu0 0.0
  %384 = vmatpush1.msra.mxu0 0.0
  %385 = vmatprep.subr.mxu0 0.0
  %386 = vmatpush1.msra.mxu0 0.0
  %387 = vmatprep.subr.mxu0 0.0
  %388 = vmatpush1.msra.mxu0 0.0
  %389 = vmatprep.subr.mxu0 0.0
  %390 = vmatpush1.msra.mxu0 0.0
  %391 = vmatprep.subr.mxu0 0.0
  %392 = vmatpush1.msra.mxu0 0.0
  %393 = vmatprep.subr.mxu0 0.0
  %394 = vmatpush1.msra.mxu0 0.0
  %395 = vmatprep.subr.mxu0 0.0
  %396 = vmatpush1.msra.mxu0 0.0
  %397 = vmatprep.subr.mxu0 0.0
  %398 = vmatpush1.msra.mxu0 0.0
  %399 = vmatprep.subr.mxu0 0.0
  %400 = vmatpush1.msra.mxu0 0.0
  %401 = vmatprep.subr.mxu0 0.0
  %402 = vmatpush1.msra.mxu0 0.0
  %403 = vmatprep.subr.mxu0 0.0
  %404 = vmatpush1.msra.mxu0 0.0
  %405 = vmatprep.subr.mxu0 0.0
  %406 = vmatpush1.msra.mxu0 0.0
  %407 = vmatprep.subr.mxu0 0.0
  %408 = vmatpush1.msra.mxu0 0.0
  %409 = vmatprep.subr.mxu0 0.0
  %410 = vmatpush1.msra.mxu0 0.0
  %411 = vmatprep.subr.mxu0 0.0
  %412 = vmatpush1.msra.mxu0 0.0
  %413 = vmatprep.subr.mxu0 0.0
  %414 = vmatpush1.msra.mxu0 0.0
  %415 = vmatprep.subr.mxu0 0.0
  %416 = vmatpush1.msra.mxu0 0.0
  %417 = vmatprep.subr.mxu0 0.0
  %418 = vmatpush1.msra.mxu0 0.0
  %419 = vmatprep.subr.mxu0 0.0
  %420 = vmatpush1.msra.mxu0 0.0
  %421 = vmatprep.subr.mxu0 0.0
  %422 = vmatpush1.msra.mxu0 0.0
  %423 = vmatprep.subr.mxu0 0.0
  %424 = vmatpush1.msra.mxu0 0.0
  %425 = vmatprep.subr.mxu0 0.0
  %426 = vmatpush1.msra.mxu0 0.0
  %427 = vmatprep.subr.mxu0 0.0
  %428 = vmatpush1.msra.mxu0 0.0
  %429 = vmatprep.subr.mxu0 0.0
  %430 = vmatpush1.msra.mxu0 0.0
  %431 = vmatprep.subr.mxu0 0.0
  %432 = vmatpush1.msra.mxu0 0.0
  %433 = vmatprep.subr.mxu0 0.0
  %434 = vmatpush1.msra.mxu0 0.0
  %435 = vmatprep.subr.mxu0 0.0
  %436 = vmatpush1.msra.mxu0 0.0
  %437 = vmatprep.mubr.f32.mxu0 0.0
  %v438 = vand.u32 %v34, 4294901760
  %439 = vmatmul.mubr.f32.gmra.mrb[0].mxu0 %v438
  %v440 = vpop.f32.mrb[0].mxu0
  %v441 = vadd.f32 %v359, %v440
  %v442 = vpop.f32.mrb[0].mxu0
  %443 = vmatprep.mubr.f32.mxu0 0.0
  %v444 = vand.u32 %v37, 4294901760
  %445 = vmatmul.mubr.f32.gmra.mrb[0].mxu0 %v444
  %v446 = vpop.f32.mrb[0].mxu0
  %v447 = vadd.f32 %v367, %v446
  %v448 = vpop.f32.mrb[0].mxu0
  %449 = vdwg.mxu0
  %450 = vmatprep.subr.mxu0 0.0
  %v451 = vand.u32 %v11, 4294901760
  %452 = vmatpush1.msra.mxu0 %v451
  %453 = vmatprep.subr.mxu0 0.0
  %454 = vmatpush1.msra.mxu0 0.0
  %455 = vmatprep.subr.mxu0 0.0
  %456 = vmatpush1.msra.mxu0 0.0
  %457 = vmatprep.subr.mxu0 0.0
  %458 = vmatpush1.msra.mxu0 0.0
  %459 = vmatprep.subr.mxu0 0.0
  %460 = vmatpush1.msra.mxu0 0.0
  %461 = vmatprep.subr.mxu0 0.0
  %462 = vmatpush1.msra.mxu0 0.0
  %463 = vmatprep.subr.mxu0 0.0
  %464 = vmatpush1.msra.mxu0 0.0
  %465 = vmatprep.subr.mxu0 0.0
  %466 = vmatpush1.msra.mxu0 0.0
  %467 = vmatprep.subr.mxu0 0.0
  %468 = vmatpush1.msra.mxu0 0.0
  %469 = vmatprep.subr.mxu0 0.0
  %470 = vmatpush1.msra.mxu0 0.0
  %471 = vmatprep.subr.mxu0 0.0
  %472 = vmatpush1.msra.mxu0 0.0
  %473 = vmatprep.subr.mxu0 0.0
  %474 = vmatpush1.msra.mxu0 0.0
  %475 = vmatprep.subr.mxu0 0.0
  %476 = vmatpush1.msra.mxu0 0.0
  %477 = vmatprep.subr.mxu0 0.0
  %478 = vmatpush1.msra.mxu0 0.0
  %479 = vmatprep.subr.mxu0 0.0
  %480 = vmatpush1.msra.mxu0 0.0
  %481 = vmatprep.subr.mxu0 0.0
  %482 = vmatpush1.msra.mxu0 0.0
  %483 = vmatprep.subr.mxu0 0.0
  %484 = vmatpush1.msra.mxu0 0.0
  %485 = vmatprep.subr.mxu0 0.0
  %486 = vmatpush1.msra.mxu0 0.0
  %487 = vmatprep.subr.mxu0 0.0
  %488 = vmatpush1.msra.mxu0 0.0
  %489 = vmatprep.subr.mxu0 0.0
  %490 = vmatpush1.msra.mxu0 0.0
  %491 = vmatprep.subr.mxu0 0.0
  %492 = vmatpush1.msra.mxu0 0.0
  %493 = vmatprep.subr.mxu0 0.0
  %494 = vmatpush1.msra.mxu0 0.0
  %495 = vmatprep.subr.mxu0 0.0
  %496 = vmatpush1.msra.mxu0 0.0
  %497 = vmatprep.subr.mxu0 0.0
  %498 = vmatpush1.msra.mxu0 0.0
  %499 = vmatprep.subr.mxu0 0.0
  %500 = vmatpush1.msra.mxu0 0.0
  %501 = vmatprep.subr.mxu0 0.0
  %502 = vmatpush1.msra.mxu0 0.0
  %503 = vmatprep.subr.mxu0 0.0
  %504 = vmatpush1.msra.mxu0 0.0
  %505 = vmatprep.subr.mxu0 0.0
  %506 = vmatpush1.msra.mxu0 0.0
  %507 = vmatprep.subr.mxu0 0.0
  %508 = vmatpush1.msra.mxu0 0.0
  %509 = vmatprep.subr.mxu0 0.0
  %510 = vmatpush1.msra.mxu0 0.0
  %511 = vmatprep.subr.mxu0 0.0
  %512 = vmatpush1.msra.mxu0 0.0
  %513 = vmatprep.subr.mxu0 0.0
  %514 = vmatpush1.msra.mxu0 0.0
  %515 = vmatprep.mubr.f32.mxu0 0.0
  %v516 = vand.u32 %v34, 4294901760
  %517 = vmatmul.mubr.f32.gmra.mrb[0].mxu0 %v516
  %v518 = vpop.f32.mrb[0].mxu0
  %v519 = vadd.f32 %v441, %v518
  %v520 = vpop.f32.mrb[0].mxu0
  %521 = vmatprep.mubr.f32.mxu0 0.0
  %v522 = vand.u32 %v37, 4294901760
  %523 = vmatmul.mubr.f32.gmra.mrb[0].mxu0 %v522
  %v524 = vpop.f32.mrb[0].mxu0
  %v525 = vadd.f32 %v447, %v524
  %v526 = vpop.f32.mrb[0].mxu0
  %527 = vdwg.mxu0
  %v528 = vsub.f32 %v14, %v519
  %v529 = vadd.f32 %v528, 1e-07
  %v530 = vmul.f32 %v529, %v529
  %vm531 = vcmask 261120
  %v532 = vsel %vm531, %v530, 0.0
  %533 = vadd.xlane.f32.xlu0 %v532
  %v534 = vpop.xlane.xlu0 %533
  %v535 = vrsqrt.pop %v534
  %v536 = vmul.f32 %v534, %v535
  %vm537 = vcmp.eq.f32.partialorder %v534, inf
  %v538 = vsel %vm537, %v534, %v536
  %vm539 = vcmp.eq.f32.partialorder %v534, 0.0
  %v540 = vand.u32 %v534, 2147483648
  %v541 = vsel %vm539, %v540, %v538
  %v542 = vsub.f32 %v14, %v525
  %v543 = vadd.f32 %v542, 1e-07
  %v544 = vmul.f32 %v543, %v543
  %v545 = vsel %vm531, %v544, 0.0
  %546 = vadd.xlane.f32.xlu0 %v545
  %v547 = vpop.xlane.xlu0 %546
  %v548 = vrsqrt.pop %v547
  %v549 = vmul.f32 %v547, %v548
  %vm550 = vcmp.eq.f32.partialorder %v547, inf
  %v551 = vsel %vm550, %v547, %v549
  %vm552 = vcmp.eq.f32.partialorder %v547, 0.0
  %v553 = vand.u32 %v547, 2147483648
  %v554 = vsel %vm552, %v553, %v551
  %v555 = vsub.f32 %v541, %v554
  %v556 = vadd.f32 %v555, 1.0
  %v557 = vmax.f32 %v556, 0.0
  %v558 = vlaneseq
  %v559 = vshrl.u32 %v558, 7
  %v560 = vstv %s12
  %v561 = vadd.s32 %v559, %v560
  %vm562 = vcmp.lt.s32.totalorder %v561, 8
  %v563 = vsel %vm562, %v557, 0.0
  %vm564 = vcmask 7168
  %v565 = vsel %vm564, %v563, 0.0
  %566 = vadd.xlane.f32.xlu0 %v565
  %v567 = vpop.xlane.xlu0 %566
  %v568 = vrot.slane %v567, 4
  %v569 = vadd.f32 %v567, %v568
  %v570 = vrot.slane %v569, 2
  %v571 = vadd.f32 %v569, %v570
  %v572 = vrot.slane %v571, 1
  %v573 = vadd.f32 %v571, %v572
  %s574 = vtos %v573
  %v575 = vstv %s574
  %576 = vst [vmem:[%s2] sm:$0xff] %v575
  // Predicated region
  $region10: #{patient_triplet_loss.1} parent=0 // pred_check
    _
  $region11: #{patient_triplet_loss.1} parent=0 // pred_check_branch
    %578 = sbr.rel (0) target = $region13
  $region12: #{patient_triplet_loss.1} parent=0 // pred_region
    _
  $region13: #{patient_triplet_loss.1} parent=0 // pred_fallthru
    _
  // Predicated region
  $region14: #{patient_triplet_loss.1} parent=0 // pred_check
    _
  $region15: #{patient_triplet_loss.1} parent=0 // pred_check_branch
    %580 = sbr.rel (0) target = $region17
  $region16: #{patient_triplet_loss.1} parent=0 // pred_region
    _
  $region17: #{patient_triplet_loss.1} parent=0 // pred_fallthru
    _

</llo_original>
